<compile_context>
chip_gen: v6e
topology: v6e:2x2x1
jax: 0.10.0
libtpu: 0.0.40
codegen_flags: <defaults>
</compile_context>

<pallas_src>
from functools import lru_cache, partial

import numpy as np

import jax
import jax.numpy as jnp
from jax.experimental import pallas as pl
from jax.experimental.pallas import tpu as pltpu

_BN_EPS = 1e-5


# --------------------------------------------------------------------------- #
# Kernel: the whole encoder forward for one batch tile, everything in VMEM.
# --------------------------------------------------------------------------- #
def _encoder_kernel(x_ref,
                    m1_ref, b1_ref,
                    m2_ref, b2_ref,
                    m3_ref, b3_ref,
                    w4_ref, b4_ref,
                    w5_ref, b5_ref,
                    o_ref):
    def block(h, m_ref, b_ref):
        # matmul on MXU (f32 accumulate), fused bias + ReLU epilogue, bf16 for next layer
        z = jnp.dot(h, m_ref[...], preferred_element_type=jnp.float32)
        return jnp.maximum(z + b_ref[...], 0.0).astype(jnp.bfloat16)

    h = block(x_ref[...], m1_ref, b1_ref)   # conv1 + bias + ReLU (BN1 folded into M2/b2)
    h = block(h, m2_ref, b2_ref)            # conv2 + bias + ReLU (BN2 folded into M3/b3)
    h = block(h, m3_ref, b3_ref)            # conv3 + bias + ReLU (BN3 folded into W4/b4)
    h = block(h, w4_ref, b4_ref)            # lin1  + bias + ReLU
    z = jnp.dot(h, w5_ref[...], preferred_element_type=jnp.float32)
    o_ref[...] = z + b5_ref[...]            # lin2 (latent head), f32 output


# --------------------------------------------------------------------------- #
# One-time parameter preparation (layout plumbing + BN folding, off the hot path)
# --------------------------------------------------------------------------- #
def _conv_dense_matrix(w_oihw, H, W, stride, pad):
    """Dense matrix M of shape (H*W*Cin, OH*OW*Cout) such that for an HWC-flattened
    input row x, x @ M equals the HWC-flattened Conv2d(x, w, stride, pad) output."""
    Cout, Cin, KH, KW = w_oihw.shape
    OH = (H + 2 * pad - KH) // stride + 1
    OW = (W + 2 * pad - KW) // stride + 1
    S = np.zeros((KH, KW, OH * OW, H * W), np.float32)
    for i in range(KH):
        for j in range(KW):
            for oh in range(OH):
                h = stride * oh + i - pad
                if not (0 <= h < H):
                    continue
                for ow in range(OW):
                    w_ = stride * ow + j - pad
                    if not (0 <= w_ < W):
                        continue
                    S[i, j, oh * OW + ow, h * W + w_] = 1.0
    wt = jnp.transpose(w_oihw, (2, 3, 1, 0))               # (KH, KW, Cin, Cout)
    M = jnp.einsum("ijob,ijcf->bcof", jnp.asarray(S), wt)  # (H*W, Cin, OH*OW, Cout)
    return M.reshape(H * W * Cin, OH * OW * Cout), OH, OW


def prepare_params(params, H, W, eps=_BN_EPS):
    """Fold convs into dense matrices, fold each BN into the NEXT layer's weight/bias
    (done in f32 before the bf16 cast), pre-permute lin1's weight to NHWC-flat order.
    Returns (prep_arrays, true_flops_per_row)."""
    prep = {}
    h, w = H, W
    prev_scale = None      # per-position (HWC-flat) BN scale of the previous layer
    prev_shift = None      # per-position (HWC-flat) BN shift of the previous layer
    flops_per_row = 0
    cout = None
    for name in ("conv1", "conv2", "conv3"):
        p = params[name]
        M, oh, ow = _conv_dense_matrix(p["w"], h, w, p["stride"], p["pad"])   # f32
        cout, cin, kh, kw = p["w"].shape
        flops_per_row += 2 * kh * kw * cin * oh * ow * cout                   # true conv FLOPs
        b = jnp.tile(p["b"].astype(jnp.float32), oh * ow)
        if prev_scale is not None:
            b = b + prev_shift @ M               # fold previous BN shift (uses unscaled M)
            M = prev_scale[:, None] * M          # fold previous BN scale (row-scale M)
        inv_std = 1.0 / jnp.sqrt(p["var"] + eps)
        scale = (p["gamma"] * inv_std).astype(jnp.float32)
        shift = (p["beta"] - p["mean"] * p["gamma"] * inv_std).astype(jnp.float32)
        prev_scale = jnp.tile(scale, oh * ow)
        prev_shift = jnp.tile(shift, oh * ow)
        prep[name] = dict(m=M.astype(jnp.bfloat16), b=b.reshape(1, -1))
        h, w = oh, ow

    # lin1 consumes PyTorch's CHW-flattened order; our activation is HWC-flattened.
    C3, H3, W3 = cout, h, w
    perm = np.zeros((H3 * W3 * C3,), np.int32)
    for hh in range(H3):
        for ww in range(W3):
            for cc in range(C3):
                perm[(hh * W3 + ww) * C3 + cc] = cc * H3 * W3 + hh * W3 + ww
    l1, l2 = params["lin1"], params["lin2"]
    W4 = l1["w"][:, perm].T.astype(jnp.float32)          # (flat_HWC, lin1)
    b4 = l1["b"].astype(jnp.float32) + prev_shift @ W4   # fold BN3 shift
    W4 = prev_scale[:, None] * W4                        # fold BN3 scale
    prep["lin1"] = dict(w=W4.astype(jnp.bfloat16), b=b4.reshape(1, -1))
    prep["lin2"] = dict(w=l2["w"].T.astype(jnp.bfloat16),
                        b=l2["b"].astype(jnp.float32).reshape(1, -1))

    flat = C3 * H3 * W3
    lin1_dim, latent = l1["w"].shape[0], l2["w"].shape[0]
    flops_per_row += 2 * (flat * lin1_dim + lin1_dim * latent)
    return prep, int(flops_per_row)


# --------------------------------------------------------------------------- #
# Batch-tile selection
# --------------------------------------------------------------------------- #
@lru_cache(maxsize=1)
def _tensorcores_per_device():
    """Best-effort TC count per device (2 on v7x); falls back to 1."""
    try:
        info = pltpu.get_tpu_info()
        for attr in ("num_cores", "num_tensorcores", "tensorcores_per_chip"):
            v = getattr(info, attr, None)
            if isinstance(v, int) and v > 0:
                return v
    except Exception:
        pass
    try:
        v = getattr(jax.devices()[0], "num_cores", None)
        if isinstance(v, int) and v > 0:
            return v
    except Exception:
        pass
    return 1


def _pick_batch_tile(np_rows, max_tb=512, min_steps=1):
    """Largest multiple-of-16 divisor of np_rows, capped at max_tb and (best-effort)
    capped so the grid has >= min_steps steps. np_rows must be a multiple of 16."""
    best = 16
    limit = max(16, min(np_rows // max(min_steps, 1), max_tb))
    for cand in range(16, limit + 1, 16):
        if np_rows % cand == 0:
            best = cand
    return best


# --------------------------------------------------------------------------- #
# Hot path: one jit, one pallas_call.
# --------------------------------------------------------------------------- #
@partial(jax.jit, static_argnames=("tb", "flops_per_row"))
def _encoder_forward_impl(x_nchw, prep, *, tb, flops_per_row):
    N = x_nchw.shape[0]
    # NCHW -> HWC-flat rows (a no-op transpose for Cin=1), bf16 matmul operand.
    x = jnp.transpose(x_nchw, (0, 2, 3, 1)).reshape(N, -1).astype(jnp.bfloat16)

    Np = -(-N // 16) * 16                      # pad only to the bf16 sublane group (16)
    if Np != N:
        x = jnp.pad(x, ((0, Np - N), (0, 0)))

    c1, c2, c3 = prep["conv1"], prep["conv2"], prep["conv3"]
    l1, l2 = prep["lin1"], prep["lin2"]
    args = (x,
            c1["m"], c1["b"],
            c2["m"], c2["b"],
            c3["m"], c3["b"],
            l1["w"], l1["b"],
            l2["w"], l2["b"])

    D0 = x.shape[1]
    D_out = l2["w"].shape[1]

    # Activations tile over the (parallel) batch grid axis; all parameters use constant
    # block indices so they stay VMEM-resident across the whole batch loop.
    in_specs = [pl.BlockSpec((tb, D0), lambda i: (i, 0))]
    for a in args[1:]:
        in_specs.append(pl.BlockSpec(tuple(a.shape), lambda i: (0, 0)))

    param_bytes = sum(int(a.size) * a.dtype.itemsize for a in args[1:])
    bytes_accessed = param_bytes + int(x.size) * x.dtype.itemsize + Np * D_out * 4
    d_max = max(int(a.shape[-1]) for a in args)
    vmem_need = (param_bytes
                 + 2 * tb * D0 * 2          # double-buffered input blocks (bf16)
                 + 2 * tb * D_out * 4       # double-buffered output blocks (f32)
                 + 4 * tb * d_max * 4)      # headroom for f32 intermediates / spill
    vmem_limit = int(min(64 << 20, max(2 * vmem_need, 8 << 20)))

    out = pl.pallas_call(
        _encoder_kernel,
        out_shape=jax.ShapeDtypeStruct((Np, D_out), jnp.float32),
        grid=(Np // tb,),
        in_specs=in_specs,
        out_specs=pl.BlockSpec((tb, D_out), lambda i: (i, 0)),
        compiler_params=pltpu.CompilerParams(
            dimension_semantics=("parallel",),
            vmem_limit_bytes=vmem_limit),
        cost_estimate=pl.CostEstimate(flops=int(flops_per_row) * Np,
                                      transcendentals=0,
                                      bytes_accessed=int(bytes_accessed)),
    )(*args)
    return out[:N]


def encoder_forward(x_nchw, prep, flops_per_row):
    N = x_nchw.shape[0]
    Np = -(-N // 16) * 16
    # On 2-TC chips (v7x) keep >= 2 grid steps so both cores get work; single step
    # is optimal on 1-TC chips (v5e/v6e) when the whole batch fits in one tile.
    min_steps = 2 if _tensorcores_per_device() > 1 else 1
    tb = _pick_batch_tile(Np, max_tb=512, min_steps=min_steps)
    return _encoder_forward_impl(x_nchw, prep, tb=tb, flops_per_row=int(flops_per_row))


# --------------------------------------------------------------------------- #
# Plain-JAX reference (in-script correctness check) and synthetic params.
# --------------------------------------------------------------------------- #
def encoder_reference(x_nchw, params, eps=_BN_EPS):
    x = x_nchw.astype(jnp.float32)
    for name in ("conv1", "conv2", "conv3"):
        p = params[name]
        x = jax.lax.conv_general_dilated(
            x, p["w"], window_strides=(p["stride"], p["stride"]),
            padding=[(p["pad"], p["pad"]), (p["pad"], p["pad"])],
            dimension_numbers=("NCHW", "OIHW", "NCHW"))
        x = x + p["b"][None, :, None, None]
        x = jnp.maximum(x, 0.0)
        inv = 1.0 / jnp.sqrt(p["var"] + eps)
        scale = (p["gamma"] * inv)[None, :, None, None]
        x = (x - p["mean"][None, :, None, None]) * scale + p["beta"][None, :, None, None]
    x = x.reshape(x.shape[0], -1)
    l1, l2 = params["lin1"], params["lin2"]
    x = jnp.maximum(x @ l1["w"].T + l1["b"], 0.0)
    return x @ l2["w"].T + l2["b"]


def make_params(key):
    """Deterministic synthetic parameters matching the PyTorch module shapes."""
    cfg = {
        "conv1": dict(filters=8, kernel=3, stride=2, pad=1, cin=1),
        "conv2": dict(filters=16, kernel=3, stride=2, pad=1, cin=8),
        "conv3": dict(filters=32, kernel=3, stride=2, pad=1, cin=16),
    }
    lin1, latent = 32, 8
    conv_out = (32, 2, 2)            # (C, H, W) after conv3 for a 16x16 input
    flat = conv_out[0] * conv_out[1] * conv_out[2]

    params = {}
    keys = jax.random.split(key, 16)
    ki = 0
    for name in ("conv1", "conv2", "conv3"):
        c = cfg[name]
        Cout, Cin, K = c["filters"], c["cin"], c["kernel"]
        params[name] = dict(
            w=0.1 * jax.random.normal(keys[ki], (Cout, Cin, K, K), jnp.float32),
            b=0.05 * jax.random.normal(keys[ki + 1], (Cout,), jnp.float32),
            gamma=1.0 + 0.1 * jax.random.normal(keys[ki + 2], (Cout,), jnp.float32),
            beta=0.05 * jax.random.normal(keys[ki + 3], (Cout,), jnp.float32),
            mean=jnp.zeros((Cout,), jnp.float32),
            var=jnp.ones((Cout,), jnp.float32),
            stride=c["stride"], pad=c["pad"],
        )
        ki += 4
    params["lin1"] = dict(
        w=0.1 * jax.random.normal(keys[ki], (lin1, flat), jnp.float32),
        b=0.05 * jax.random.normal(keys[ki + 1], (lin1,), jnp.float32),
    )
    params["lin2"] = dict(
        w=0.1 * jax.random.normal(keys[ki + 2], (latent, lin1), jnp.float32),
        b=0.05 * jax.random.normal(keys[ki + 3], (latent,), jnp.float32),
    )
    return params


if __name__ == "__main__":
    key = jax.random.PRNGKey(0)
    k_x, k_p = jax.random.split(key)
    x = jax.random.normal(k_x, (2, 1, 16, 16), jnp.float32)   # NCHW like PyTorch
    params = make_params(k_p)

    prep, flops_per_row = prepare_params(params, H=16, W=16)  # one-time setup
    out = encoder_forward(x, prep, flops_per_row)             # single fused kernel
    out = jax.block_until_ready(out)

    assert out.shape == (2, 8), out.shape
    assert bool(jnp.all(jnp.isfinite(out)))

    ref = encoder_reference(x, params)
    err = float(jnp.max(jnp.abs(out - ref)))
    assert err < 2e-2, f"max abs error vs plain-JAX reference: {err}"
    print("KERNEL_OK")
</pallas_src>

<mosaic_0001>
module attributes {stable_mosaic.version = 11 : i64} {
  func.func @_encoder_kernel(%arg0: i32, %arg1: memref<16x256xbf16, #tpu.memory_space<vmem>>, %arg2: memref<256x512xbf16, #tpu.memory_space<vmem>>, %arg3: memref<1x512xf32, #tpu.memory_space<vmem>>, %arg4: memref<512x256xbf16, #tpu.memory_space<vmem>>, %arg5: memref<1x256xf32, #tpu.memory_space<vmem>>, %arg6: memref<256x128xbf16, #tpu.memory_space<vmem>>, %arg7: memref<1x128xf32, #tpu.memory_space<vmem>>, %arg8: memref<128x32xbf16, #tpu.memory_space<vmem>>, %arg9: memref<1x32xf32, #tpu.memory_space<vmem>>, %arg10: memref<32x8xbf16, #tpu.memory_space<vmem>>, %arg11: memref<1x8xf32, #tpu.memory_space<vmem>>, %arg12: memref<16x8xf32, #tpu.memory_space<vmem>>) attributes {dimension_semantics = [#tpu.dimension_semantics<parallel>], iteration_bounds = array<i64: 1>, scalar_prefetch = 0 : i64, scratch_operands = 0 : i64, tpu.core_type = #tpu.core_type<tc>, window_params = [{transform_indices = @transform_0, window_bounds = array<i64: 16, 256>}, {pipeline_mode = #tpu.pipeline_mode<synchronous>, transform_indices = @transform_1, window_bounds = array<i64: 256, 512>}, {pipeline_mode = #tpu.pipeline_mode<synchronous>, transform_indices = @transform_2, window_bounds = array<i64: 1, 512>}, {pipeline_mode = #tpu.pipeline_mode<synchronous>, transform_indices = @transform_3, window_bounds = array<i64: 512, 256>}, {pipeline_mode = #tpu.pipeline_mode<synchronous>, transform_indices = @transform_4, window_bounds = array<i64: 1, 256>}, {pipeline_mode = #tpu.pipeline_mode<synchronous>, transform_indices = @transform_5, window_bounds = array<i64: 256, 128>}, {pipeline_mode = #tpu.pipeline_mode<synchronous>, transform_indices = @transform_6, window_bounds = array<i64: 1, 128>}, {pipeline_mode = #tpu.pipeline_mode<synchronous>, transform_indices = @transform_7, window_bounds = array<i64: 128, 32>}, {pipeline_mode = #tpu.pipeline_mode<synchronous>, transform_indices = @transform_8, window_bounds = array<i64: 1, 32>}, {pipeline_mode = #tpu.pipeline_mode<synchronous>, transform_indices = @transform_9, window_bounds = array<i64: 32, 8>}, {pipeline_mode = #tpu.pipeline_mode<synchronous>, transform_indices = @transform_10, window_bounds = array<i64: 1, 8>}, {transform_indices = @transform_11, window_bounds = array<i64: 16, 8>}]} {
    %c0 = arith.constant 0 : index
    %c0_0 = arith.constant 0 : index
    %0 = vector.load %arg1[%c0, %c0_0] : memref<16x256xbf16, #tpu.memory_space<vmem>>, vector<16x256xbf16>
    %c0_1 = arith.constant 0 : index
    %c0_2 = arith.constant 0 : index
    %1 = vector.load %arg2[%c0_1, %c0_2] : memref<256x512xbf16, #tpu.memory_space<vmem>>, vector<256x512xbf16>
    %cst = arith.constant dense<0.000000e+00> : vector<16x512xf32>
    %2 = tpu.matmul %0, %1, %cst {dimension_numbers = #tpu.dot_dimension_numbers<[1], [0], [0], [1], [0, 0, 1, 1], [], []>} : vector<16x256xbf16>, vector<256x512xbf16>, vector<16x512xf32> -> vector<16x512xf32>
    %c0_3 = arith.constant 0 : index
    %c0_4 = arith.constant 0 : index
    %3 = vector.load %arg3[%c0_3, %c0_4] : memref<1x512xf32, #tpu.memory_space<vmem>>, vector<1x512xf32>
    %4 = vector.broadcast %3 : vector<1x512xf32> to vector<16x512xf32>
    %5 = arith.addf %2, %4 : vector<16x512xf32>
    %cst_5 = arith.constant 0.000000e+00 : f32
    %6 = vector.broadcast %cst_5 : f32 to vector<16x512xf32>
    %7 = arith.maximumf %5, %6 : vector<16x512xf32>
    %8 = arith.truncf %7 : vector<16x512xf32> to vector<16x512xbf16>
    %c0_6 = arith.constant 0 : index
    %c0_7 = arith.constant 0 : index
    %9 = vector.load %arg4[%c0_6, %c0_7] : memref<512x256xbf16, #tpu.memory_space<vmem>>, vector<512x256xbf16>
    %cst_8 = arith.constant dense<0.000000e+00> : vector<16x256xf32>
    %10 = tpu.matmul %8, %9, %cst_8 {dimension_numbers = #tpu.dot_dimension_numbers<[1], [0], [0], [1], [0, 0, 1, 1], [], []>} : vector<16x512xbf16>, vector<512x256xbf16>, vector<16x256xf32> -> vector<16x256xf32>
    %c0_9 = arith.constant 0 : index
    %c0_10 = arith.constant 0 : index
    %11 = vector.load %arg5[%c0_9, %c0_10] : memref<1x256xf32, #tpu.memory_space<vmem>>, vector<1x256xf32>
    %12 = vector.broadcast %11 : vector<1x256xf32> to vector<16x256xf32>
    %13 = arith.addf %10, %12 : vector<16x256xf32>
    %cst_11 = arith.constant 0.000000e+00 : f32
    %14 = vector.broadcast %cst_11 : f32 to vector<16x256xf32>
    %15 = arith.maximumf %13, %14 : vector<16x256xf32>
    %16 = arith.truncf %15 : vector<16x256xf32> to vector<16x256xbf16>
    %c0_12 = arith.constant 0 : index
    %c0_13 = arith.constant 0 : index
    %17 = vector.load %arg6[%c0_12, %c0_13] : memref<256x128xbf16, #tpu.memory_space<vmem>>, vector<256x128xbf16>
    %cst_14 = arith.constant dense<0.000000e+00> : vector<16x128xf32>
    %18 = tpu.matmul %16, %17, %cst_14 {dimension_numbers = #tpu.dot_dimension_numbers<[1], [0], [0], [1], [0, 0, 1, 1], [], []>} : vector<16x256xbf16>, vector<256x128xbf16>, vector<16x128xf32> -> vector<16x128xf32>
    %c0_15 = arith.constant 0 : index
    %c0_16 = arith.constant 0 : index
    %19 = vector.load %arg7[%c0_15, %c0_16] : memref<1x128xf32, #tpu.memory_space<vmem>>, vector<1x128xf32>
    %20 = vector.broadcast %19 : vector<1x128xf32> to vector<16x128xf32>
    %21 = arith.addf %18, %20 : vector<16x128xf32>
    %cst_17 = arith.constant 0.000000e+00 : f32
    %22 = vector.broadcast %cst_17 : f32 to vector<16x128xf32>
    %23 = arith.maximumf %21, %22 : vector<16x128xf32>
    %24 = arith.truncf %23 : vector<16x128xf32> to vector<16x128xbf16>
    %c0_18 = arith.constant 0 : index
    %c0_19 = arith.constant 0 : index
    %25 = vector.load %arg8[%c0_18, %c0_19] : memref<128x32xbf16, #tpu.memory_space<vmem>>, vector<128x32xbf16>
    %cst_20 = arith.constant dense<0.000000e+00> : vector<16x32xf32>
    %26 = tpu.matmul %24, %25, %cst_20 {dimension_numbers = #tpu.dot_dimension_numbers<[1], [0], [0], [1], [0, 0, 1, 1], [], []>} : vector<16x128xbf16>, vector<128x32xbf16>, vector<16x32xf32> -> vector<16x32xf32>
    %c0_21 = arith.constant 0 : index
    %c0_22 = arith.constant 0 : index
    %27 = vector.load %arg9[%c0_21, %c0_22] : memref<1x32xf32, #tpu.memory_space<vmem>>, vector<1x32xf32>
    %28 = vector.broadcast %27 : vector<1x32xf32> to vector<16x32xf32>
    %29 = arith.addf %26, %28 : vector<16x32xf32>
    %cst_23 = arith.constant 0.000000e+00 : f32
    %30 = vector.broadcast %cst_23 : f32 to vector<16x32xf32>
    %31 = arith.maximumf %29, %30 : vector<16x32xf32>
    %32 = arith.truncf %31 : vector<16x32xf32> to vector<16x32xbf16>
    %c0_24 = arith.constant 0 : index
    %c0_25 = arith.constant 0 : index
    %33 = vector.load %arg10[%c0_24, %c0_25] : memref<32x8xbf16, #tpu.memory_space<vmem>>, vector<32x8xbf16>
    %cst_26 = arith.constant dense<0.000000e+00> : vector<16x8xf32>
    %34 = tpu.matmul %32, %33, %cst_26 {dimension_numbers = #tpu.dot_dimension_numbers<[1], [0], [0], [1], [0, 0, 1, 1], [], []>} : vector<16x32xbf16>, vector<32x8xbf16>, vector<16x8xf32> -> vector<16x8xf32>
    %c0_27 = arith.constant 0 : index
    %c0_28 = arith.constant 0 : index
    %35 = vector.load %arg11[%c0_27, %c0_28] : memref<1x8xf32, #tpu.memory_space<vmem>>, vector<1x8xf32>
    %36 = vector.broadcast %35 : vector<1x8xf32> to vector<16x8xf32>
    %37 = arith.addf %34, %36 : vector<16x8xf32>
    %c0_29 = arith.constant 0 : index
    %c0_30 = arith.constant 0 : index
    %38 = vector.load %arg12[%c0_29, %c0_30] : memref<16x8xf32, #tpu.memory_space<vmem>>, vector<16x8xf32>
    tpu.vector_store %arg12[%c0_29, %c0_30], %37 {strides = array<i32>} : memref<16x8xf32, #tpu.memory_space<vmem>>, vector<16x8xf32>,
    return
  }
  func.func @transform_0(%arg0: i32) -> (i32, i32) {
    %c0_i32 = arith.constant 0 : i32
    %c0_i32_0 = arith.constant 0 : i32
    return %arg0, %c0_i32 : i32, i32
  }
  func.func @transform_1(%arg0: i32) -> (i32, i32) {
    %c0_i32 = arith.constant 0 : i32
    %c0_i32_0 = arith.constant 0 : i32
    %c0_i32_1 = arith.constant 0 : i32
    return %c0_i32, %c0_i32_0 : i32, i32
  }
  func.func @transform_2(%arg0: i32) -> (i32, i32) {
    %c0_i32 = arith.constant 0 : i32
    %c0_i32_0 = arith.constant 0 : i32
    %c0_i32_1 = arith.constant 0 : i32
    return %c0_i32, %c0_i32_0 : i32, i32
  }
  func.func @transform_3(%arg0: i32) -> (i32, i32) {
    %c0_i32 = arith.constant 0 : i32
    %c0_i32_0 = arith.constant 0 : i32
    %c0_i32_1 = arith.constant 0 : i32
    return %c0_i32, %c0_i32_0 : i32, i32
  }
  func.func @transform_4(%arg0: i32) -> (i32, i32) {
    %c0_i32 = arith.constant 0 : i32
    %c0_i32_0 = arith.constant 0 : i32
    %c0_i32_1 = arith.constant 0 : i32
    return %c0_i32, %c0_i32_0 : i32, i32
  }
  func.func @transform_5(%arg0: i32) -> (i32, i32) {
    %c0_i32 = arith.constant 0 : i32
    %c0_i32_0 = arith.constant 0 : i32
    %c0_i32_1 = arith.constant 0 : i32
    return %c0_i32, %c0_i32_0 : i32, i32
  }
  func.func @transform_6(%arg0: i32) -> (i32, i32) {
    %c0_i32 = arith.constant 0 : i32
    %c0_i32_0 = arith.constant 0 : i32
    %c0_i32_1 = arith.constant 0 : i32
    return %c0_i32, %c0_i32_0 : i32, i32
  }
  func.func @transform_7(%arg0: i32) -> (i32, i32) {
    %c0_i32 = arith.constant 0 : i32
    %c0_i32_0 = arith.constant 0 : i32
    %c0_i32_1 = arith.constant 0 : i32
    return %c0_i32, %c0_i32_0 : i32, i32
  }
  func.func @transform_8(%arg0: i32) -> (i32, i32) {
    %c0_i32 = arith.constant 0 : i32
    %c0_i32_0 = arith.constant 0 : i32
    %c0_i32_1 = arith.constant 0 : i32
    return %c0_i32, %c0_i32_0 : i32, i32
  }
  func.func @transform_9(%arg0: i32) -> (i32, i32) {
    %c0_i32 = arith.constant 0 : i32
    %c0_i32_0 = arith.constant 0 : i32
    %c0_i32_1 = arith.constant 0 : i32
    return %c0_i32, %c0_i32_0 : i32, i32
  }
  func.func @transform_10(%arg0: i32) -> (i32, i32) {
    %c0_i32 = arith.constant 0 : i32
    %c0_i32_0 = arith.constant 0 : i32
    %c0_i32_1 = arith.constant 0 : i32
    return %c0_i32, %c0_i32_0 : i32, i32
  }
  func.func @transform_11(%arg0: i32) -> (i32, i32) {
    %c0_i32 = arith.constant 0 : i32
    %c0_i32_0 = arith.constant 0 : i32
    return %arg0, %c0_i32 : i32, i32
  }
}

</mosaic_0001>

<llo_original>
// kernel: _encoder_forward_impl.1
$region0: #{_encoder_forward_impl.1}
  #allocation0 [shape = 'u32[]', space=smem, size = 0x4, offset = 0x4, fixed_abs, tag = 'smem constant byte address 0x4 - core index']
  #allocation1 [shape = 'u32[144,128]{1,0:T(1,128)}', space=vmem, size = 0x12000, scoped, tag = 'internal scratch']
  %s0 = inlined_call_operand.vmem [shape: bf16[16,256], index: 0, kind: input, shape index: {}]
  %s1 = inlined_call_operand.hbm [shape: bf16[256,512], index: 1, kind: input, shape index: {}]
  %s2 = inlined_call_operand.vmem [shape: f32[1,512], index: 2, kind: input, shape index: {}]
  %s3 = inlined_call_operand.hbm [shape: bf16[512,256], index: 3, kind: input, shape index: {}]
  %s4 = inlined_call_operand.vmem [shape: f32[1,256], index: 4, kind: input, shape index: {}]
  %s5 = inlined_call_operand.vmem [shape: bf16[256,128], index: 5, kind: input, shape index: {}]
  %s6 = inlined_call_operand.vmem [shape: f32[1,128], index: 6, kind: input, shape index: {}]
  %s7 = inlined_call_operand.vmem [shape: bf16[128,32], index: 7, kind: input, shape index: {}]
  %s8 = inlined_call_operand.vmem [shape: f32[1,32], index: 8, kind: input, shape index: {}]
  %s9 = inlined_call_operand.vmem [shape: bf16[32,8], index: 9, kind: input, shape index: {}]
  %s10 = inlined_call_operand.vmem [shape: f32[1,8], index: 10, kind: input, shape index: {}]
  %s11 = inlined_call_operand.vmem [shape: f32[16,8], index: 11, kind: output, shape index: {}]
  %s12 = sld [smem:[#allocation0]]
  $region62: #{_encoder_forward_impl.1} parent=0
    _
  %s14 = ssub.s32 1, %s12
  %s15 = scalar_select 0, %s14, %s12
  $region1: #{_encoder_forward_impl.1} parent=0
    #allocation2 [shape = 'u8[262144]{0}', space=vmem, size = 0x40000, scoped, tag = 'input window, operand 1, single buffered']
    #allocation3 [shape = 's32[1]{0}', space=sflag, size = 0x4, scoped, tag = 'scoped memory for _encoder_forward_impl.1']
    #allocation4 [shape = 'u8[262144]{0}', space=vmem, size = 0x40000, scoped, tag = 'input window, operand 3, single buffered']
    #allocation5 [shape = 's32[1]{0}', space=sflag, size = 0x4, scoped, tag = 'scoped memory for _encoder_forward_impl.1']
    %16 = vsyncpa [#allocation3], 0
    %17 = vsyncpa [#allocation5], 0
    // Predicated region
    $region2: #{_encoder_forward_impl.1} parent=1 // pred_check
      _
    $region3: #{_encoder_forward_impl.1} parent=1 // pred_check_branch
      %19 = sbr.rel (0) target = $region5
    $region4: #{_encoder_forward_impl.1} parent=1 // pred_region
      _
    $region5: #{_encoder_forward_impl.1} parent=1 // pred_fallthru
      _
    // Predicated region
    $region6: #{_encoder_forward_impl.1} parent=1 // pred_check
      _
    $region7: #{_encoder_forward_impl.1} parent=1 // pred_check_branch
      %21 = sbr.rel (0) target = $region9
    $region8: #{_encoder_forward_impl.1} parent=1 // pred_region
      %s23 = ssub.s32 8192, 8192
      %24 = vsyncadd [#allocation3], %s23
      %s25 = sshll.u32 [#allocation2], 4
      %s26 = int_to_ptr.vmem [resolvable:$true] %s25
      %31 = dma.hbm_to_vmem [thread:$0]  %s1, 8192, %s26, [#allocation3], 256, 256, 16
    $region9: #{_encoder_forward_impl.1} parent=1 // pred_fallthru
      _
    // Predicated region
    $region10: #{_encoder_forward_impl.1} parent=1 // pred_check
      _
    $region11: #{_encoder_forward_impl.1} parent=1 // pred_check_branch
      %33 = sbr.rel (0) target = $region13
    $region12: #{_encoder_forward_impl.1} parent=1 // pred_region
      _
    $region13: #{_encoder_forward_impl.1} parent=1 // pred_fallthru
      _
    // Predicated region
    $region14: #{_encoder_forward_impl.1} parent=1 // pred_check
      _
    $region15: #{_encoder_forward_impl.1} parent=1 // pred_check_branch
      %35 = sbr.rel (0) target = $region17
    $region16: #{_encoder_forward_impl.1} parent=1 // pred_region
      %s37 = ssub.s32 8192, 8192
      %38 = vsyncadd [#allocation5], %s37
      %s39 = sshll.u32 [#allocation4], 4
      %s40 = int_to_ptr.vmem [resolvable:$true] %s39
      %45 = dma.hbm_to_vmem [thread:$0]  %s3, 8192, %s40, [#allocation5], 128, 128, 8
    $region17: #{_encoder_forward_impl.1} parent=1 // pred_fallthru
      _
    // Predicated region
    $region18: #{_encoder_forward_impl.1} parent=1 // pred_check
      _
    $region19: #{_encoder_forward_impl.1} parent=1 // pred_check_branch
      %47 = sbr.rel (0) target = $region21
    $region20: #{_encoder_forward_impl.1} parent=1 // pred_region
      _
    $region21: #{_encoder_forward_impl.1} parent=1 // pred_fallthru
      _
    // Predicated region
    $region22: #{_encoder_forward_impl.1} parent=1 // pred_check
      _
    $region23: #{_encoder_forward_impl.1} parent=1 // pred_check_branch
      %49 = sbr.rel (0) target = $region25
    $region24: #{_encoder_forward_impl.1} parent=1 // pred_region
      _
    $region25: #{_encoder_forward_impl.1} parent=1 // pred_fallthru
      _
    // Predicated region
    $region26: #{_encoder_forward_impl.1} parent=1 // pred_check
      _
    $region27: #{_encoder_forward_impl.1} parent=1 // pred_check_branch
      %51 = sbr.rel (0) target = $region29
    $region28: #{_encoder_forward_impl.1} parent=1 // pred_region
      _
    $region29: #{_encoder_forward_impl.1} parent=1 // pred_fallthru
      _
    // Predicated region
    $region30: #{_encoder_forward_impl.1} parent=1 // pred_check
      _
    $region31: #{_encoder_forward_impl.1} parent=1 // pred_check_branch
      %53 = sbr.rel (0) target = $region33
    $region32: #{_encoder_forward_impl.1} parent=1 // pred_region
      _
    $region33: #{_encoder_forward_impl.1} parent=1 // pred_fallthru
      _
    // Predicated region
    $region34: #{_encoder_forward_impl.1} parent=1 // pred_check
      _
    $region35: #{_encoder_forward_impl.1} parent=1 // pred_check_branch
      %55 = sbr.rel (0) target = $region37
    $region36: #{_encoder_forward_impl.1} parent=1 // pred_region
      _
    $region37: #{_encoder_forward_impl.1} parent=1 // pred_fallthru
      _
    // Predicated region
    $region38: #{_encoder_forward_impl.1} parent=1 // pred_check
      _
    $region39: #{_encoder_forward_impl.1} parent=1 // pred_check_branch
      %57 = sbr.rel (0) target = $region41
    $region40: #{_encoder_forward_impl.1} parent=1 // pred_region
      _
    $region41: #{_encoder_forward_impl.1} parent=1 // pred_fallthru
      _
    // Predicated region
    $region42: #{_encoder_forward_impl.1} parent=1 // pred_check
      _
    $region43: #{_encoder_forward_impl.1} parent=1 // pred_check_branch
      %59 = sbr.rel (0) target = $region45
    $region44: #{_encoder_forward_impl.1} parent=1 // pred_region
      _
    $region45: #{_encoder_forward_impl.1} parent=1 // pred_fallthru
      _
    // Predicated region
    $region46: #{_encoder_forward_impl.1} parent=1 // pred_check
      _
    $region47: #{_encoder_forward_impl.1} parent=1 // pred_check_branch
      %61 = sbr.rel (0) target = $region49
    $region48: #{_encoder_forward_impl.1} parent=1 // pred_region
      %62 = dma.done [#allocation3], 8192
    $region49: #{_encoder_forward_impl.1} parent=1 // pred_fallthru
      _
    // Predicated region
    $region50: #{_encoder_forward_impl.1} parent=1 // pred_check
      _
    $region51: #{_encoder_forward_impl.1} parent=1 // pred_check_branch
      %64 = sbr.rel (0) target = $region53
    $region52: #{_encoder_forward_impl.1} parent=1 // pred_region
      %65 = dma.done [#allocation5], 8192
    $region53: #{_encoder_forward_impl.1} parent=1 // pred_fallthru
      _
    %v67 = vld [vmem:[%s0] sm:$0xff]
    %v68 = vld [vmem:[%s0 + $0x8] sm:$0xff]
    %v69 = vld [vmem:[#allocation2] sm:$0xff]
    %v70 = vld [vmem:[#allocation2 + $0x8] sm:$0xff]
    %v71 = vld [vmem:[#allocation2 + $0x10] sm:$0xff]
    %v72 = vld [vmem:[#allocation2 + $0x18] sm:$0xff]
    %v73 = vld [vmem:[#allocation2 + $0x20] sm:$0xff]
    %v74 = vld [vmem:[#allocation2 + $0x28] sm:$0xff]
    %v75 = vld [vmem:[#allocation2 + $0x30] sm:$0xff]
    %v76 = vld [vmem:[#allocation2 + $0x38] sm:$0xff]
    %v77 = vld [vmem:[#allocation2 + $0x40] sm:$0xff]
    %v78 = vld [vmem:[#allocation2 + $0x48] sm:$0xff]
    %v79 = vld [vmem:[#allocation2 + $0x50] sm:$0xff]
    %v80 = vld [vmem:[#allocation2 + $0x58] sm:$0xff]
    %v81 = vld [vmem:[#allocation2 + $0x60] sm:$0xff]
    %v82 = vld [vmem:[#allocation2 + $0x68] sm:$0xff]
    %v83 = vld [vmem:[#allocation2 + $0x70] sm:$0xff]
    %v84 = vld [vmem:[#allocation2 + $0x78] sm:$0xff]
    %v85 = vld [vmem:[#allocation2 + $0x80] sm:$0xff]
    %v86 = vld [vmem:[#allocation2 + $0x88] sm:$0xff]
    %v87 = vld [vmem:[#allocation2 + $0x90] sm:$0xff]
    %v88 = vld [vmem:[#allocation2 + $0x98] sm:$0xff]
    %v89 = vld [vmem:[#allocation2 + $0xa0] sm:$0xff]
    %v90 = vld [vmem:[#allocation2 + $0xa8] sm:$0xff]
    %v91 = vld [vmem:[#allocation2 + $0xb0] sm:$0xff]
    %v92 = vld [vmem:[#allocation2 + $0xb8] sm:$0xff]
    %v93 = vld [vmem:[#allocation2 + $0xc0] sm:$0xff]
    %v94 = vld [vmem:[#allocation2 + $0xc8] sm:$0xff]
    %v95 = vld [vmem:[#allocation2 + $0xd0] sm:$0xff]
    %v96 = vld [vmem:[#allocation2 + $0xd8] sm:$0xff]
    %v97 = vld [vmem:[#allocation2 + $0xe0] sm:$0xff]
    %v98 = vld [vmem:[#allocation2 + $0xe8] sm:$0xff]
    %v99 = vld [vmem:[#allocation2 + $0xf0] sm:$0xff]
    %v100 = vld [vmem:[#allocation2 + $0xf8] sm:$0xff]
    %v101 = vld [vmem:[#allocation2 + $0x100] sm:$0xff]
    %v102 = vld [vmem:[#allocation2 + $0x108] sm:$0xff]
    %v103 = vld [vmem:[#allocation2 + $0x110] sm:$0xff]
    %v104 = vld [vmem:[#allocation2 + $0x118] sm:$0xff]
    %v105 = vld [vmem:[#allocation2 + $0x120] sm:$0xff]
    %v106 = vld [vmem:[#allocation2 + $0x128] sm:$0xff]
    %v107 = vld [vmem:[#allocation2 + $0x130] sm:$0xff]
    %v108 = vld [vmem:[#allocation2 + $0x138] sm:$0xff]
    %v109 = vld [vmem:[#allocation2 + $0x140] sm:$0xff]
    %v110 = vld [vmem:[#allocation2 + $0x148] sm:$0xff]
    %v111 = vld [vmem:[#allocation2 + $0x150] sm:$0xff]
    %v112 = vld [vmem:[#allocation2 + $0x158] sm:$0xff]
    %v113 = vld [vmem:[#allocation2 + $0x160] sm:$0xff]
    %v114 = vld [vmem:[#allocation2 + $0x168] sm:$0xff]
    %v115 = vld [vmem:[#allocation2 + $0x170] sm:$0xff]
    %v116 = vld [vmem:[#allocation2 + $0x178] sm:$0xff]
    %v117 = vld [vmem:[#allocation2 + $0x180] sm:$0xff]
    %v118 = vld [vmem:[#allocation2 + $0x188] sm:$0xff]
    %v119 = vld [vmem:[#allocation2 + $0x190] sm:$0xff]
    %v120 = vld [vmem:[#allocation2 + $0x198] sm:$0xff]
    %v121 = vld [vmem:[#allocation2 + $0x1a0] sm:$0xff]
    %v122 = vld [vmem:[#allocation2 + $0x1a8] sm:$0xff]
    %v123 = vld [vmem:[#allocation2 + $0x1b0] sm:$0xff]
    %v124 = vld [vmem:[#allocation2 + $0x1b8] sm:$0xff]
    %v125 = vld [vmem:[#allocation2 + $0x1c0] sm:$0xff]
    %v126 = vld [vmem:[#allocation2 + $0x1c8] sm:$0xff]
    %v127 = vld [vmem:[#allocation2 + $0x1d0] sm:$0xff]
    %v128 = vld [vmem:[#allocation2 + $0x1d8] sm:$0xff]
    %v129 = vld [vmem:[#allocation2 + $0x1e0] sm:$0xff]
    %v130 = vld [vmem:[#allocation2 + $0x1e8] sm:$0xff]
    %v131 = vld [vmem:[#allocation2 + $0x1f0] sm:$0xff]
    %v132 = vld [vmem:[#allocation2 + $0x1f8] sm:$0xff]
    %v133 = vld [vmem:[%s2] sm:$0xf]
    %v135 = vlaneseq
    %v136 = vshrl.u32 %v135, 7
    %v137 = vsub.s32 0, %v136
    %v138 = vrot.slane %v133, %v137
    %v139 = vlaneseq
    %v140 = vshrl.u32 %v139, 7
    %v141 = vsub.s32 1, %v140
    %v142 = vrot.slane %v133, %v141
    %v143 = vlaneseq
    %v144 = vshrl.u32 %v143, 7
    %v145 = vsub.s32 2, %v144
    %v146 = vrot.slane %v133, %v145
    %v147 = vlaneseq
    %v148 = vshrl.u32 %v147, 7
    %v149 = vsub.s32 3, %v148
    %v150 = vrot.slane %v133, %v149
    %v157 = vunpack.c.l.b16 %v67
    %v158 = vunpack.c.h.b16 %v67
    %v159 = vunpack.c.l.b16 %v68
    %v160 = vunpack.c.h.b16 %v68
    %v161 = vpack.c.b16 %v159, %v157
    %v162 = vpack.c.b16 %v160, %v158
    %v229 = vunpack.c.l.b16 %v69
    %v230 = vunpack.c.h.b16 %v69
    %v231 = vunpack.c.l.b16 %v70
    %v232 = vunpack.c.h.b16 %v70
    %v233 = vunpack.c.l.b16 %v71
    %v234 = vunpack.c.h.b16 %v71
    %v235 = vunpack.c.l.b16 %v72
    %v236 = vunpack.c.h.b16 %v72
    %v237 = vunpack.c.l.b16 %v73
    %v238 = vunpack.c.h.b16 %v73
    %v239 = vunpack.c.l.b16 %v74
    %v240 = vunpack.c.h.b16 %v74
    %v241 = vunpack.c.l.b16 %v75
    %v242 = vunpack.c.h.b16 %v75
    %v243 = vunpack.c.l.b16 %v76
    %v244 = vunpack.c.h.b16 %v76
    %v245 = vunpack.c.l.b16 %v77
    %v246 = vunpack.c.h.b16 %v77
    %v247 = vunpack.c.l.b16 %v78
    %v248 = vunpack.c.h.b16 %v78
    %v249 = vunpack.c.l.b16 %v79
    %v250 = vunpack.c.h.b16 %v79
    %v251 = vunpack.c.l.b16 %v80
    %v252 = vunpack.c.h.b16 %v80
    %v253 = vunpack.c.l.b16 %v81
    %v254 = vunpack.c.h.b16 %v81
    %v255 = vunpack.c.l.b16 %v82
    %v256 = vunpack.c.h.b16 %v82
    %v257 = vunpack.c.l.b16 %v83
    %v258 = vunpack.c.h.b16 %v83
    %v259 = vunpack.c.l.b16 %v84
    %v260 = vunpack.c.h.b16 %v84
    %v261 = vunpack.c.l.b16 %v85
    %v262 = vunpack.c.h.b16 %v85
    %v263 = vunpack.c.l.b16 %v86
    %v264 = vunpack.c.h.b16 %v86
    %v265 = vunpack.c.l.b16 %v87
    %v266 = vunpack.c.h.b16 %v87
    %v267 = vunpack.c.l.b16 %v88
    %v268 = vunpack.c.h.b16 %v88
    %v269 = vunpack.c.l.b16 %v89
    %v270 = vunpack.c.h.b16 %v89
    %v271 = vunpack.c.l.b16 %v90
    %v272 = vunpack.c.h.b16 %v90
    %v273 = vunpack.c.l.b16 %v91
    %v274 = vunpack.c.h.b16 %v91
    %v275 = vunpack.c.l.b16 %v92
    %v276 = vunpack.c.h.b16 %v92
    %v277 = vunpack.c.l.b16 %v93
    %v278 = vunpack.c.h.b16 %v93
    %v279 = vunpack.c.l.b16 %v94
    %v280 = vunpack.c.h.b16 %v94
    %v281 = vunpack.c.l.b16 %v95
    %v282 = vunpack.c.h.b16 %v95
    %v283 = vunpack.c.l.b16 %v96
    %v284 = vunpack.c.h.b16 %v96
    %v285 = vunpack.c.l.b16 %v97
    %v286 = vunpack.c.h.b16 %v97
    %v287 = vunpack.c.l.b16 %v98
    %v288 = vunpack.c.h.b16 %v98
    %v289 = vunpack.c.l.b16 %v99
    %v290 = vunpack.c.h.b16 %v99
    %v291 = vunpack.c.l.b16 %v100
    %v292 = vunpack.c.h.b16 %v100
    %v293 = vunpack.c.l.b16 %v101
    %v294 = vunpack.c.h.b16 %v101
    %v295 = vunpack.c.l.b16 %v102
    %v296 = vunpack.c.h.b16 %v102
    %v297 = vunpack.c.l.b16 %v103
    %v298 = vunpack.c.h.b16 %v103
    %v299 = vunpack.c.l.b16 %v104
    %v300 = vunpack.c.h.b16 %v104
    %v301 = vunpack.c.l.b16 %v105
    %v302 = vunpack.c.h.b16 %v105
    %v303 = vunpack.c.l.b16 %v106
    %v304 = vunpack.c.h.b16 %v106
    %v305 = vunpack.c.l.b16 %v107
    %v306 = vunpack.c.h.b16 %v107
    %v307 = vunpack.c.l.b16 %v108
    %v308 = vunpack.c.h.b16 %v108
    %v309 = vunpack.c.l.b16 %v109
    %v310 = vunpack.c.h.b16 %v109
    %v311 = vunpack.c.l.b16 %v110
    %v312 = vunpack.c.h.b16 %v110
    %v313 = vunpack.c.l.b16 %v111
    %v314 = vunpack.c.h.b16 %v111
    %v315 = vunpack.c.l.b16 %v112
    %v316 = vunpack.c.h.b16 %v112
    %v317 = vunpack.c.l.b16 %v113
    %v318 = vunpack.c.h.b16 %v113
    %v319 = vunpack.c.l.b16 %v114
    %v320 = vunpack.c.h.b16 %v114
    %v321 = vunpack.c.l.b16 %v115
    %v322 = vunpack.c.h.b16 %v115
    %v323 = vunpack.c.l.b16 %v116
    %v324 = vunpack.c.h.b16 %v116
    %v325 = vunpack.c.l.b16 %v117
    %v326 = vunpack.c.h.b16 %v117
    %v327 = vunpack.c.l.b16 %v118
    %v328 = vunpack.c.h.b16 %v118
    %v329 = vunpack.c.l.b16 %v119
    %v330 = vunpack.c.h.b16 %v119
    %v331 = vunpack.c.l.b16 %v120
    %v332 = vunpack.c.h.b16 %v120
    %v333 = vunpack.c.l.b16 %v121
    %v334 = vunpack.c.h.b16 %v121
    %v335 = vunpack.c.l.b16 %v122
    %v336 = vunpack.c.h.b16 %v122
    %v337 = vunpack.c.l.b16 %v123
    %v338 = vunpack.c.h.b16 %v123
    %v339 = vunpack.c.l.b16 %v124
    %v340 = vunpack.c.h.b16 %v124
    %v341 = vunpack.c.l.b16 %v125
    %v342 = vunpack.c.h.b16 %v125
    %v343 = vunpack.c.l.b16 %v126
    %v344 = vunpack.c.h.b16 %v126
    %v345 = vunpack.c.l.b16 %v127
    %v346 = vunpack.c.h.b16 %v127
    %v347 = vunpack.c.l.b16 %v128
    %v348 = vunpack.c.h.b16 %v128
    %v349 = vunpack.c.l.b16 %v129
    %v350 = vunpack.c.h.b16 %v129
    %v351 = vunpack.c.l.b16 %v130
    %v352 = vunpack.c.h.b16 %v130
    %v353 = vunpack.c.l.b16 %v131
    %v354 = vunpack.c.h.b16 %v131
    %v355 = vunpack.c.l.b16 %v132
    %v356 = vunpack.c.h.b16 %v132
    %v357 = vpack.c.b16 %v233, %v229
    %v358 = vpack.c.b16 %v234, %v230
    %v359 = vpack.c.b16 %v235, %v231
    %v360 = vpack.c.b16 %v236, %v232
    %v361 = vpack.c.b16 %v241, %v237
    %v362 = vpack.c.b16 %v242, %v238
    %v363 = vpack.c.b16 %v243, %v239
    %v364 = vpack.c.b16 %v244, %v240
    %v365 = vpack.c.b16 %v249, %v245
    %v366 = vpack.c.b16 %v250, %v246
    %v367 = vpack.c.b16 %v251, %v247
    %v368 = vpack.c.b16 %v252, %v248
    %v369 = vpack.c.b16 %v257, %v253
    %v370 = vpack.c.b16 %v258, %v254
    %v371 = vpack.c.b16 %v259, %v255
    %v372 = vpack.c.b16 %v260, %v256
    %v373 = vpack.c.b16 %v265, %v261
    %v374 = vpack.c.b16 %v266, %v262
    %v375 = vpack.c.b16 %v267, %v263
    %v376 = vpack.c.b16 %v268, %v264
    %v377 = vpack.c.b16 %v273, %v269
    %v378 = vpack.c.b16 %v274, %v270
    %v379 = vpack.c.b16 %v275, %v271
    %v380 = vpack.c.b16 %v276, %v272
    %v381 = vpack.c.b16 %v281, %v277
    %v382 = vpack.c.b16 %v282, %v278
    %v383 = vpack.c.b16 %v283, %v279
    %v384 = vpack.c.b16 %v284, %v280
    %v385 = vpack.c.b16 %v289, %v285
    %v386 = vpack.c.b16 %v290, %v286
    %v387 = vpack.c.b16 %v291, %v287
    %v388 = vpack.c.b16 %v292, %v288
    %v389 = vpack.c.b16 %v297, %v293
    %v390 = vpack.c.b16 %v298, %v294
    %v391 = vpack.c.b16 %v299, %v295
    %v392 = vpack.c.b16 %v300, %v296
    %v393 = vpack.c.b16 %v305, %v301
    %v394 = vpack.c.b16 %v306, %v302
    %v395 = vpack.c.b16 %v307, %v303
    %v396 = vpack.c.b16 %v308, %v304
    %v397 = vpack.c.b16 %v313, %v309
    %v398 = vpack.c.b16 %v314, %v310
    %v399 = vpack.c.b16 %v315, %v311
    %v400 = vpack.c.b16 %v316, %v312
    %v401 = vpack.c.b16 %v321, %v317
    %v402 = vpack.c.b16 %v322, %v318
    %v403 = vpack.c.b16 %v323, %v319
    %v404 = vpack.c.b16 %v324, %v320
    %v405 = vpack.c.b16 %v329, %v325
    %v406 = vpack.c.b16 %v330, %v326
    %v407 = vpack.c.b16 %v331, %v327
    %v408 = vpack.c.b16 %v332, %v328
    %v409 = vpack.c.b16 %v337, %v333
    %v410 = vpack.c.b16 %v338, %v334
    %v411 = vpack.c.b16 %v339, %v335
    %v412 = vpack.c.b16 %v340, %v336
    %v413 = vpack.c.b16 %v345, %v341
    %v414 = vpack.c.b16 %v346, %v342
    %v415 = vpack.c.b16 %v347, %v343
    %v416 = vpack.c.b16 %v348, %v344
    %v417 = vpack.c.b16 %v353, %v349
    %v418 = vpack.c.b16 %v354, %v350
    %v419 = vpack.c.b16 %v355, %v351
    %v420 = vpack.c.b16 %v356, %v352
    %485 = vmatprep.subr.bf16.mxu0 %v386
    %486 = vmatpush1.bf16.msra.mxu0 %v385
    %487 = vmatprep.subr.bf16.mxu0 %v382
    %488 = vmatpush1.bf16.msra.mxu0 %v381
    %489 = vmatprep.subr.bf16.mxu0 %v378
    %490 = vmatpush1.bf16.msra.mxu0 %v377
    %491 = vmatprep.subr.bf16.mxu0 %v374
    %492 = vmatpush1.bf16.msra.mxu0 %v373
    %493 = vmatprep.subr.bf16.mxu0 %v370
    %494 = vmatpush1.bf16.msra.mxu0 %v369
    %495 = vmatprep.subr.bf16.mxu0 %v366
    %496 = vmatpush1.bf16.msra.mxu0 %v365
    %497 = vmatprep.subr.bf16.mxu0 %v362
    %498 = vmatpush1.bf16.msra.mxu0 %v361
    %499 = vmatprep.subr.bf16.mxu0 %v358
    %500 = vmatpush1.bf16.msra.mxu0 %v357
    %501 = vmatprep.subr.bf16.mxu0 %v418
    %502 = vmatpush2.bf16.msra.mxu0 %v417
    %503 = vmatprep.subr.bf16.mxu0 %v414
    %504 = vmatpush2.bf16.msra.mxu0 %v413
    %505 = vmatprep.subr.bf16.mxu0 %v410
    %506 = vmatpush2.bf16.msra.mxu0 %v409
    %507 = vmatprep.subr.bf16.mxu0 %v406
    %508 = vmatpush2.bf16.msra.mxu0 %v405
    %509 = vmatprep.subr.bf16.mxu0 %v402
    %510 = vmatpush2.bf16.msra.mxu0 %v401
    %511 = vmatprep.subr.bf16.mxu0 %v398
    %512 = vmatpush2.bf16.msra.mxu0 %v397
    %513 = vmatprep.subr.bf16.mxu0 %v394
    %514 = vmatpush2.bf16.msra.mxu0 %v393
    %515 = vmatprep.subr.bf16.mxu0 %v390
    %516 = vmatpush2.bf16.msra.mxu0 %v389
    %517 = vmatprep.mubr.bf16.mxu0 %v162
    %518 = vmatmul.mubr.bf16.gmra.mxu0 %v161
    %v519 = vpop.f32.mrf.mxu0
    %v520 = vadd.f32 %v138, %v519
    %v521 = vpop.f32.mrf.mxu0
    %v522 = vadd.f32 %v142, %v521
    %v523 = vpop.f32.mrf.mxu0
    %v524 = vadd.f32 %v138, %v523
    %v525 = vpop.f32.mrf.mxu0
    %v526 = vadd.f32 %v142, %v525
    %527 = vdwg.mxu0
    %528 = vmatprep.subr.bf16.mxu0 %v388
    %529 = vmatpush1.bf16.msra.mxu0 %v387
    %530 = vmatprep.subr.bf16.mxu0 %v384
    %531 = vmatpush1.bf16.msra.mxu0 %v383
    %532 = vmatprep.subr.bf16.mxu0 %v380
    %533 = vmatpush1.bf16.msra.mxu0 %v379
    %534 = vmatprep.subr.bf16.mxu0 %v376
    %535 = vmatpush1.bf16.msra.mxu0 %v375
    %536 = vmatprep.subr.bf16.mxu0 %v372
    %537 = vmatpush1.bf16.msra.mxu0 %v371
    %538 = vmatprep.subr.bf16.mxu0 %v368
    %539 = vmatpush1.bf16.msra.mxu0 %v367
    %540 = vmatprep.subr.bf16.mxu0 %v364
    %541 = vmatpush1.bf16.msra.mxu0 %v363
    %542 = vmatprep.subr.bf16.mxu0 %v360
    %543 = vmatpush1.bf16.msra.mxu0 %v359
    %544 = vmatprep.subr.bf16.mxu0 %v420
    %545 = vmatpush2.bf16.msra.mxu0 %v419
    %546 = vmatprep.subr.bf16.mxu0 %v416
    %547 = vmatpush2.bf16.msra.mxu0 %v415
    %548 = vmatprep.subr.bf16.mxu0 %v412
    %549 = vmatpush2.bf16.msra.mxu0 %v411
    %550 = vmatprep.subr.bf16.mxu0 %v408
    %551 = vmatpush2.bf16.msra.mxu0 %v407
    %552 = vmatprep.subr.bf16.mxu0 %v404
    %553 = vmatpush2.bf16.msra.mxu0 %v403
    %554 = vmatprep.subr.bf16.mxu0 %v400
    %555 = vmatpush2.bf16.msra.mxu0 %v399
    %556 = vmatprep.subr.bf16.mxu0 %v396
    %557 = vmatpush2.bf16.msra.mxu0 %v395
    %558 = vmatprep.subr.bf16.mxu0 %v392
    %559 = vmatpush2.bf16.msra.mxu0 %v391
    %560 = vmatprep.mubr.bf16.mxu0 %v162
    %561 = vmatmul.mubr.bf16.gmra.mxu0 %v161
    %v562 = vpop.f32.mrf.mxu0
    %v563 = vadd.f32 %v146, %v562
    %v564 = vpop.f32.mrf.mxu0
    %v565 = vadd.f32 %v150, %v564
    %v566 = vpop.f32.mrf.mxu0
    %v567 = vadd.f32 %v146, %v566
    %v568 = vpop.f32.mrf.mxu0
    %v569 = vadd.f32 %v150, %v568
    %570 = vdwg.mxu0
    %v571 = vmax.f32 %v520, 0.0
    %v572 = vmax.f32 %v522, 0.0
    %v573 = vmax.f32 %v563, 0.0
    %v574 = vmax.f32 %v565, 0.0
    %v575 = vmax.f32 %v524, 0.0
    %v576 = vmax.f32 %v526, 0.0
    %v577 = vmax.f32 %v567, 0.0
    %v578 = vmax.f32 %v569, 0.0
    %v579 = vpack.c.bf16 %v575, %v571
    %v580 = vpack.c.bf16 %v576, %v572
    %v581 = vpack.c.bf16 %v577, %v573
    %v582 = vpack.c.bf16 %v578, %v574
    %v583 = vld [vmem:[#allocation4] sm:$0xff]
    %v584 = vld [vmem:[#allocation4 + $0x8] sm:$0xff]
    %v585 = vld [vmem:[#allocation4 + $0x10] sm:$0xff]
    %v586 = vld [vmem:[#allocation4 + $0x18] sm:$0xff]
    %v587 = vld [vmem:[#allocation4 + $0x20] sm:$0xff]
    %v588 = vld [vmem:[#allocation4 + $0x28] sm:$0xff]
    %v589 = vld [vmem:[#allocation4 + $0x30] sm:$0xff]
    %v590 = vld [vmem:[#allocation4 + $0x38] sm:$0xff]
    %v591 = vld [vmem:[#allocation4 + $0x40] sm:$0xff]
    %v592 = vld [vmem:[#allocation4 + $0x48] sm:$0xff]
    %v593 = vld [vmem:[#allocation4 + $0x50] sm:$0xff]
    %v594 = vld [vmem:[#allocation4 + $0x58] sm:$0xff]
    %v595 = vld [vmem:[#allocation4 + $0x60] sm:$0xff]
    %v596 = vld [vmem:[#allocation4 + $0x68] sm:$0xff]
    %v597 = vld [vmem:[#allocation4 + $0x70] sm:$0xff]
    %v598 = vld [vmem:[#allocation4 + $0x78] sm:$0xff]
    %v599 = vld [vmem:[#allocation4 + $0x80] sm:$0xff]
    %v600 = vld [vmem:[#allocation4 + $0x88] sm:$0xff]
    %v601 = vld [vmem:[#allocation4 + $0x90] sm:$0xff]
    %v602 = vld [vmem:[#allocation4 + $0x98] sm:$0xff]
    %v603 = vld [vmem:[#allocation4 + $0xa0] sm:$0xff]
    %v604 = vld [vmem:[#allocation4 + $0xa8] sm:$0xff]
    %v605 = vld [vmem:[#allocation4 + $0xb0] sm:$0xff]
    %v606 = vld [vmem:[#allocation4 + $0xb8] sm:$0xff]
    %v607 = vld [vmem:[#allocation4 + $0xc0] sm:$0xff]
    %v608 = vld [vmem:[#allocation4 + $0xc8] sm:$0xff]
    %v609 = vld [vmem:[#allocation4 + $0xd0] sm:$0xff]
    %v610 = vld [vmem:[#allocation4 + $0xd8] sm:$0xff]
    %v611 = vld [vmem:[#allocation4 + $0xe0] sm:$0xff]
    %v612 = vld [vmem:[#allocation4 + $0xe8] sm:$0xff]
    %v613 = vld [vmem:[#allocation4 + $0xf0] sm:$0xff]
    %v614 = vld [vmem:[#allocation4 + $0xf8] sm:$0xff]
    %v615 = vld [vmem:[#allocation4 + $0x100] sm:$0xff]
    %v616 = vld [vmem:[#allocation4 + $0x108] sm:$0xff]
    %v617 = vld [vmem:[#allocation4 + $0x110] sm:$0xff]
    %v618 = vld [vmem:[#allocation4 + $0x118] sm:$0xff]
    %v619 = vld [vmem:[#allocation4 + $0x120] sm:$0xff]
    %v620 = vld [vmem:[#allocation4 + $0x128] sm:$0xff]
    %v621 = vld [vmem:[#allocation4 + $0x130] sm:$0xff]
    %v622 = vld [vmem:[#allocation4 + $0x138] sm:$0xff]
    %v623 = vld [vmem:[#allocation4 + $0x140] sm:$0xff]
    %v624 = vld [vmem:[#allocation4 + $0x148] sm:$0xff]
    %v625 = vld [vmem:[#allocation4 + $0x150] sm:$0xff]
    %v626 = vld [vmem:[#allocation4 + $0x158] sm:$0xff]
    %v627 = vld [vmem:[#allocation4 + $0x160] sm:$0xff]
    %v628 = vld [vmem:[#allocation4 + $0x168] sm:$0xff]
    %v629 = vld [vmem:[#allocation4 + $0x170] sm:$0xff]
    %v630 = vld [vmem:[#allocation4 + $0x178] sm:$0xff]
    %v631 = vld [vmem:[#allocation4 + $0x180] sm:$0xff]
    %v632 = vld [vmem:[#allocation4 + $0x188] sm:$0xff]
    %v633 = vld [vmem:[#allocation4 + $0x190] sm:$0xff]
    %v634 = vld [vmem:[#allocation4 + $0x198] sm:$0xff]
    %v635 = vld [vmem:[#allocation4 + $0x1a0] sm:$0xff]
    %v636 = vld [vmem:[#allocation4 + $0x1a8] sm:$0xff]
    %v637 = vld [vmem:[#allocation4 + $0x1b0] sm:$0xff]
    %v638 = vld [vmem:[#allocation4 + $0x1b8] sm:$0xff]
    %v639 = vld [vmem:[#allocation4 + $0x1c0] sm:$0xff]
    %v640 = vld [vmem:[#allocation4 + $0x1c8] sm:$0xff]
    %v641 = vld [vmem:[#allocation4 + $0x1d0] sm:$0xff]
    %v642 = vld [vmem:[#allocation4 + $0x1d8] sm:$0xff]
    %v643 = vld [vmem:[#allocation4 + $0x1e0] sm:$0xff]
    %v644 = vld [vmem:[#allocation4 + $0x1e8] sm:$0xff]
    %v645 = vld [vmem:[#allocation4 + $0x1f0] sm:$0xff]
    %v646 = vld [vmem:[#allocation4 + $0x1f8] sm:$0xff]
    %v647 = vld [vmem:[%s4] sm:$0x3]
    %v649 = vlaneseq
    %v650 = vshrl.u32 %v649, 7
    %v651 = vsub.s32 0, %v650
    %v652 = vrot.slane %v647, %v651
    %v653 = vlaneseq
    %v654 = vshrl.u32 %v653, 7
    %v655 = vsub.s32 1, %v654
    %v656 = vrot.slane %v647, %v655
    %v723 = vunpack.c.l.b16 %v583
    %v724 = vunpack.c.h.b16 %v583
    %v725 = vunpack.c.l.b16 %v584
    %v726 = vunpack.c.h.b16 %v584
    %v727 = vunpack.c.l.b16 %v585
    %v728 = vunpack.c.h.b16 %v585
    %v729 = vunpack.c.l.b16 %v586
    %v730 = vunpack.c.h.b16 %v586
    %v731 = vunpack.c.l.b16 %v587
    %v732 = vunpack.c.h.b16 %v587
    %v733 = vunpack.c.l.b16 %v588
    %v734 = vunpack.c.h.b16 %v588
    %v735 = vunpack.c.l.b16 %v589
    %v736 = vunpack.c.h.b16 %v589
    %v737 = vunpack.c.l.b16 %v590
    %v738 = vunpack.c.h.b16 %v590
    %v739 = vunpack.c.l.b16 %v591
    %v740 = vunpack.c.h.b16 %v591
    %v741 = vunpack.c.l.b16 %v592
    %v742 = vunpack.c.h.b16 %v592
    %v743 = vunpack.c.l.b16 %v593
    %v744 = vunpack.c.h.b16 %v593
    %v745 = vunpack.c.l.b16 %v594
    %v746 = vunpack.c.h.b16 %v594
    %v747 = vunpack.c.l.b16 %v595
    %v748 = vunpack.c.h.b16 %v595
    %v749 = vunpack.c.l.b16 %v596
    %v750 = vunpack.c.h.b16 %v596
    %v751 = vunpack.c.l.b16 %v597
    %v752 = vunpack.c.h.b16 %v597
    %v753 = vunpack.c.l.b16 %v598
    %v754 = vunpack.c.h.b16 %v598
    %v755 = vunpack.c.l.b16 %v599
    %v756 = vunpack.c.h.b16 %v599
    %v757 = vunpack.c.l.b16 %v600
    %v758 = vunpack.c.h.b16 %v600
    %v759 = vunpack.c.l.b16 %v601
    %v760 = vunpack.c.h.b16 %v601
    %v761 = vunpack.c.l.b16 %v602
    %v762 = vunpack.c.h.b16 %v602
    %v763 = vunpack.c.l.b16 %v603
    %v764 = vunpack.c.h.b16 %v603
    %v765 = vunpack.c.l.b16 %v604
    %v766 = vunpack.c.h.b16 %v604
    %v767 = vunpack.c.l.b16 %v605
    %v768 = vunpack.c.h.b16 %v605
    %v769 = vunpack.c.l.b16 %v606
    %v770 = vunpack.c.h.b16 %v606
    %v771 = vunpack.c.l.b16 %v607
    %v772 = vunpack.c.h.b16 %v607
    %v773 = vunpack.c.l.b16 %v608
    %v774 = vunpack.c.h.b16 %v608
    %v775 = vunpack.c.l.b16 %v609
    %v776 = vunpack.c.h.b16 %v609
    %v777 = vunpack.c.l.b16 %v610
    %v778 = vunpack.c.h.b16 %v610
    %v779 = vunpack.c.l.b16 %v611
    %v780 = vunpack.c.h.b16 %v611
    %v781 = vunpack.c.l.b16 %v612
    %v782 = vunpack.c.h.b16 %v612
    %v783 = vunpack.c.l.b16 %v613
    %v784 = vunpack.c.h.b16 %v613
    %v785 = vunpack.c.l.b16 %v614
    %v786 = vunpack.c.h.b16 %v614
    %v787 = vunpack.c.l.b16 %v615
    %v788 = vunpack.c.h.b16 %v615
    %v789 = vunpack.c.l.b16 %v616
    %v790 = vunpack.c.h.b16 %v616
    %v791 = vunpack.c.l.b16 %v617
    %v792 = vunpack.c.h.b16 %v617
    %v793 = vunpack.c.l.b16 %v618
    %v794 = vunpack.c.h.b16 %v618
    %v795 = vunpack.c.l.b16 %v619
    %v796 = vunpack.c.h.b16 %v619
    %v797 = vunpack.c.l.b16 %v620
    %v798 = vunpack.c.h.b16 %v620
    %v799 = vunpack.c.l.b16 %v621
    %v800 = vunpack.c.h.b16 %v621
    %v801 = vunpack.c.l.b16 %v622
    %v802 = vunpack.c.h.b16 %v622
    %v803 = vunpack.c.l.b16 %v623
    %v804 = vunpack.c.h.b16 %v623
    %v805 = vunpack.c.l.b16 %v624
    %v806 = vunpack.c.h.b16 %v624
    %v807 = vunpack.c.l.b16 %v625
    %v808 = vunpack.c.h.b16 %v625
    %v809 = vunpack.c.l.b16 %v626
    %v810 = vunpack.c.h.b16 %v626
    %v811 = vunpack.c.l.b16 %v627
    %v812 = vunpack.c.h.b16 %v627
    %v813 = vunpack.c.l.b16 %v628
    %v814 = vunpack.c.h.b16 %v628
    %v815 = vunpack.c.l.b16 %v629
    %v816 = vunpack.c.h.b16 %v629
    %v817 = vunpack.c.l.b16 %v630
    %v818 = vunpack.c.h.b16 %v630
    %v819 = vunpack.c.l.b16 %v631
    %v820 = vunpack.c.h.b16 %v631
    %v821 = vunpack.c.l.b16 %v632
    %v822 = vunpack.c.h.b16 %v632
    %v823 = vunpack.c.l.b16 %v633
    %v824 = vunpack.c.h.b16 %v633
    %v825 = vunpack.c.l.b16 %v634
    %v826 = vunpack.c.h.b16 %v634
    %v827 = vunpack.c.l.b16 %v635
    %v828 = vunpack.c.h.b16 %v635
    %v829 = vunpack.c.l.b16 %v636
    %v830 = vunpack.c.h.b16 %v636
    %v831 = vunpack.c.l.b16 %v637
    %v832 = vunpack.c.h.b16 %v637
    %v833 = vunpack.c.l.b16 %v638
    %v834 = vunpack.c.h.b16 %v638
    %v835 = vunpack.c.l.b16 %v639
    %v836 = vunpack.c.h.b16 %v639
    %v837 = vunpack.c.l.b16 %v640
    %v838 = vunpack.c.h.b16 %v640
    %v839 = vunpack.c.l.b16 %v641
    %v840 = vunpack.c.h.b16 %v641
    %v841 = vunpack.c.l.b16 %v642
    %v842 = vunpack.c.h.b16 %v642
    %v843 = vunpack.c.l.b16 %v643
    %v844 = vunpack.c.h.b16 %v643
    %v845 = vunpack.c.l.b16 %v644
    %v846 = vunpack.c.h.b16 %v644
    %v847 = vunpack.c.l.b16 %v645
    %v848 = vunpack.c.h.b16 %v645
    %v849 = vunpack.c.l.b16 %v646
    %v850 = vunpack.c.h.b16 %v646
    %v851 = vpack.c.b16 %v725, %v723
    %v852 = vpack.c.b16 %v726, %v724
    %v853 = vpack.c.b16 %v729, %v727
    %v854 = vpack.c.b16 %v730, %v728
    %v855 = vpack.c.b16 %v733, %v731
    %v856 = vpack.c.b16 %v734, %v732
    %v857 = vpack.c.b16 %v737, %v735
    %v858 = vpack.c.b16 %v738, %v736
    %v859 = vpack.c.b16 %v741, %v739
    %v860 = vpack.c.b16 %v742, %v740
    %v861 = vpack.c.b16 %v745, %v743
    %v862 = vpack.c.b16 %v746, %v744
    %v863 = vpack.c.b16 %v749, %v747
    %v864 = vpack.c.b16 %v750, %v748
    %v865 = vpack.c.b16 %v753, %v751
    %v866 = vpack.c.b16 %v754, %v752
    %v867 = vpack.c.b16 %v757, %v755
    %v868 = vpack.c.b16 %v758, %v756
    %v869 = vpack.c.b16 %v761, %v759
    %v870 = vpack.c.b16 %v762, %v760
    %v871 = vpack.c.b16 %v765, %v763
    %v872 = vpack.c.b16 %v766, %v764
    %v873 = vpack.c.b16 %v769, %v767
    %v874 = vpack.c.b16 %v770, %v768
    %v875 = vpack.c.b16 %v773, %v771
    %v876 = vpack.c.b16 %v774, %v772
    %v877 = vpack.c.b16 %v777, %v775
    %v878 = vpack.c.b16 %v778, %v776
    %v879 = vpack.c.b16 %v781, %v779
    %v880 = vpack.c.b16 %v782, %v780
    %v881 = vpack.c.b16 %v785, %v783
    %v882 = vpack.c.b16 %v786, %v784
    %v883 = vpack.c.b16 %v789, %v787
    %v884 = vpack.c.b16 %v790, %v788
    %v885 = vpack.c.b16 %v793, %v791
    %v886 = vpack.c.b16 %v794, %v792
    %v887 = vpack.c.b16 %v797, %v795
    %v888 = vpack.c.b16 %v798, %v796
    %v889 = vpack.c.b16 %v801, %v799
    %v890 = vpack.c.b16 %v802, %v800
    %v891 = vpack.c.b16 %v805, %v803
    %v892 = vpack.c.b16 %v806, %v804
    %v893 = vpack.c.b16 %v809, %v807
    %v894 = vpack.c.b16 %v810, %v808
    %v895 = vpack.c.b16 %v813, %v811
    %v896 = vpack.c.b16 %v814, %v812
    %v897 = vpack.c.b16 %v817, %v815
    %v898 = vpack.c.b16 %v818, %v816
    %v899 = vpack.c.b16 %v821, %v819
    %v900 = vpack.c.b16 %v822, %v820
    %v901 = vpack.c.b16 %v825, %v823
    %v902 = vpack.c.b16 %v826, %v824
    %v903 = vpack.c.b16 %v829, %v827
    %v904 = vpack.c.b16 %v830, %v828
    %v905 = vpack.c.b16 %v833, %v831
    %v906 = vpack.c.b16 %v834, %v832
    %v907 = vpack.c.b16 %v837, %v835
    %v908 = vpack.c.b16 %v838, %v836
    %v909 = vpack.c.b16 %v841, %v839
    %v910 = vpack.c.b16 %v842, %v840
    %v911 = vpack.c.b16 %v845, %v843
    %v912 = vpack.c.b16 %v846, %v844
    %v913 = vpack.c.b16 %v849, %v847
    %v914 = vpack.c.b16 %v850, %v848
    %979 = vmatprep.subr.bf16.mxu0 %v866
    %980 = vmatpush1.bf16.msra.mxu0 %v865
    %981 = vmatprep.subr.bf16.mxu0 %v864
    %982 = vmatpush1.bf16.msra.mxu0 %v863
    %983 = vmatprep.subr.bf16.mxu0 %v862
    %984 = vmatpush1.bf16.msra.mxu0 %v861
    %985 = vmatprep.subr.bf16.mxu0 %v860
    %986 = vmatpush1.bf16.msra.mxu0 %v859
    %987 = vmatprep.subr.bf16.mxu0 %v858
    %988 = vmatpush1.bf16.msra.mxu0 %v857
    %989 = vmatprep.subr.bf16.mxu0 %v856
    %990 = vmatpush1.bf16.msra.mxu0 %v855
    %991 = vmatprep.subr.bf16.mxu0 %v854
    %992 = vmatpush1.bf16.msra.mxu0 %v853
    %993 = vmatprep.subr.bf16.mxu0 %v852
    %994 = vmatpush1.bf16.msra.mxu0 %v851
    %995 = vmatprep.subr.bf16.mxu0 %v882
    %996 = vmatpush2.bf16.msra.mxu0 %v881
    %997 = vmatprep.subr.bf16.mxu0 %v880
    %998 = vmatpush2.bf16.msra.mxu0 %v879
    %999 = vmatprep.subr.bf16.mxu0 %v878
    %1000 = vmatpush2.bf16.msra.mxu0 %v877
    %1001 = vmatprep.subr.bf16.mxu0 %v876
    %1002 = vmatpush2.bf16.msra.mxu0 %v875
    %1003 = vmatprep.subr.bf16.mxu0 %v874
    %1004 = vmatpush2.bf16.msra.mxu0 %v873
    %1005 = vmatprep.subr.bf16.mxu0 %v872
    %1006 = vmatpush2.bf16.msra.mxu0 %v871
    %1007 = vmatprep.subr.bf16.mxu0 %v870
    %1008 = vmatpush2.bf16.msra.mxu0 %v869
    %1009 = vmatprep.subr.bf16.mxu0 %v868
    %1010 = vmatpush2.bf16.msra.mxu0 %v867
    %1011 = vmatprep.mubr.bf16.mxu0 %v580
    %1012 = vmatmul.mubr.bf16.gmra.mxu0 %v579
    %v1013 = vpop.f32.mrf.mxu0
    %v1014 = vadd.f32 %v652, %v1013
    %v1015 = vpop.f32.mrf.mxu0
    %v1016 = vadd.f32 %v656, %v1015
    %v1017 = vpop.f32.mrf.mxu0
    %v1018 = vadd.f32 %v652, %v1017
    %v1019 = vpop.f32.mrf.mxu0
    %v1020 = vadd.f32 %v656, %v1019
    %1021 = vdwg.mxu0
    %1022 = vmatprep.subr.bf16.mxu0 %v898
    %1023 = vmatpush1.bf16.msra.mxu0 %v897
    %1024 = vmatprep.subr.bf16.mxu0 %v896
    %1025 = vmatpush1.bf16.msra.mxu0 %v895
    %1026 = vmatprep.subr.bf16.mxu0 %v894
    %1027 = vmatpush1.bf16.msra.mxu0 %v893
    %1028 = vmatprep.subr.bf16.mxu0 %v892
    %1029 = vmatpush1.bf16.msra.mxu0 %v891
    %1030 = vmatprep.subr.bf16.mxu0 %v890
    %1031 = vmatpush1.bf16.msra.mxu0 %v889
    %1032 = vmatprep.subr.bf16.mxu0 %v888
    %1033 = vmatpush1.bf16.msra.mxu0 %v887
    %1034 = vmatprep.subr.bf16.mxu0 %v886
    %1035 = vmatpush1.bf16.msra.mxu0 %v885
    %1036 = vmatprep.subr.bf16.mxu0 %v884
    %1037 = vmatpush1.bf16.msra.mxu0 %v883
    %1038 = vmatprep.subr.bf16.mxu0 %v914
    %1039 = vmatpush2.bf16.msra.mxu0 %v913
    %1040 = vmatprep.subr.bf16.mxu0 %v912
    %1041 = vmatpush2.bf16.msra.mxu0 %v911
    %1042 = vmatprep.subr.bf16.mxu0 %v910
    %1043 = vmatpush2.bf16.msra.mxu0 %v909
    %1044 = vmatprep.subr.bf16.mxu0 %v908
    %1045 = vmatpush2.bf16.msra.mxu0 %v907
    %1046 = vmatprep.subr.bf16.mxu0 %v906
    %1047 = vmatpush2.bf16.msra.mxu0 %v905
    %1048 = vmatprep.subr.bf16.mxu0 %v904
    %1049 = vmatpush2.bf16.msra.mxu0 %v903
    %1050 = vmatprep.subr.bf16.mxu0 %v902
    %1051 = vmatpush2.bf16.msra.mxu0 %v901
    %1052 = vmatprep.subr.bf16.mxu0 %v900
    %1053 = vmatpush2.bf16.msra.mxu0 %v899
    %1054 = vmatprep.mubr.bf16.mxu0 %v582
    %1055 = vmatmul.mubr.bf16.gmra.mxu0 %v581
    %v1056 = vpop.f32.mrf.mxu0
    %v1057 = vadd.f32 %v1014, %v1056
    %v1058 = vpop.f32.mrf.mxu0
    %v1059 = vadd.f32 %v1016, %v1058
    %v1060 = vpop.f32.mrf.mxu0
    %v1061 = vadd.f32 %v1018, %v1060
    %v1062 = vpop.f32.mrf.mxu0
    %v1063 = vadd.f32 %v1020, %v1062
    %1064 = vdwg.mxu0
    %v1065 = vmax.f32 %v1057, 0.0
    %v1066 = vmax.f32 %v1059, 0.0
    %v1067 = vmax.f32 %v1061, 0.0
    %v1068 = vmax.f32 %v1063, 0.0
    %v1069 = vpack.c.bf16 %v1067, %v1065
    %v1070 = vpack.c.bf16 %v1068, %v1066
    %v1071 = vld [vmem:[%s5] sm:$0xf]
    %v1072 = vld [vmem:[%s5 + $0x4] sm:$0xf]
    %v1073 = vld [vmem:[%s5 + $0x8] sm:$0xf]
    %v1074 = vld [vmem:[%s5 + $0xc] sm:$0xf]
    %v1075 = vld [vmem:[%s5 + $0x10] sm:$0xf]
    %v1076 = vld [vmem:[%s5 + $0x14] sm:$0xf]
    %v1077 = vld [vmem:[%s5 + $0x18] sm:$0xf]
    %v1078 = vld [vmem:[%s5 + $0x1c] sm:$0xf]
    %v1079 = vld [vmem:[%s5 + $0x20] sm:$0xf]
    %v1080 = vld [vmem:[%s5 + $0x24] sm:$0xf]
    %v1081 = vld [vmem:[%s5 + $0x28] sm:$0xf]
    %v1082 = vld [vmem:[%s5 + $0x2c] sm:$0xf]
    %v1083 = vld [vmem:[%s5 + $0x30] sm:$0xf]
    %v1084 = vld [vmem:[%s5 + $0x34] sm:$0xf]
    %v1085 = vld [vmem:[%s5 + $0x38] sm:$0xf]
    %v1086 = vld [vmem:[%s5 + $0x3c] sm:$0xf]
    %v1087 = vld [vmem:[%s5 + $0x40] sm:$0xf]
    %v1088 = vld [vmem:[%s5 + $0x44] sm:$0xf]
    %v1089 = vld [vmem:[%s5 + $0x48] sm:$0xf]
    %v1090 = vld [vmem:[%s5 + $0x4c] sm:$0xf]
    %v1091 = vld [vmem:[%s5 + $0x50] sm:$0xf]
    %v1092 = vld [vmem:[%s5 + $0x54] sm:$0xf]
    %v1093 = vld [vmem:[%s5 + $0x58] sm:$0xf]
    %v1094 = vld [vmem:[%s5 + $0x5c] sm:$0xf]
    %v1095 = vld [vmem:[%s5 + $0x60] sm:$0xf]
    %v1096 = vld [vmem:[%s5 + $0x64] sm:$0xf]
    %v1097 = vld [vmem:[%s5 + $0x68] sm:$0xf]
    %v1098 = vld [vmem:[%s5 + $0x6c] sm:$0xf]
    %v1099 = vld [vmem:[%s5 + $0x70] sm:$0xf]
    %v1100 = vld [vmem:[%s5 + $0x74] sm:$0xf]
    %v1101 = vld [vmem:[%s5 + $0x78] sm:$0xf]
    %v1102 = vld [vmem:[%s5 + $0x7c] sm:$0xf]
    %v1103 = vld [vmem:[%s6] sm:$0x1]
    %v1105 = vlaneseq
    %v1106 = vshrl.u32 %v1105, 7
    %v1107 = vsub.s32 0, %v1106
    %v1108 = vrot.slane %v1103, %v1107
    %v1142 = vunpack.c.l.b16 %v1071
    %v1143 = vunpack.c.l.b16 %v1072
    %v1144 = vunpack.c.l.b16 %v1073
    %v1145 = vunpack.c.l.b16 %v1074
    %v1146 = vunpack.c.l.b16 %v1075
    %v1147 = vunpack.c.l.b16 %v1076
    %v1148 = vunpack.c.l.b16 %v1077
    %v1149 = vunpack.c.l.b16 %v1078
    %v1150 = vunpack.c.l.b16 %v1079
    %v1151 = vunpack.c.l.b16 %v1080
    %v1152 = vunpack.c.l.b16 %v1081
    %v1153 = vunpack.c.l.b16 %v1082
    %v1154 = vunpack.c.l.b16 %v1083
    %v1155 = vunpack.c.l.b16 %v1084
    %v1156 = vunpack.c.l.b16 %v1085
    %v1157 = vunpack.c.l.b16 %v1086
    %v1158 = vunpack.c.l.b16 %v1087
    %v1159 = vunpack.c.l.b16 %v1088
    %v1160 = vunpack.c.l.b16 %v1089
    %v1161 = vunpack.c.l.b16 %v1090
    %v1162 = vunpack.c.l.b16 %v1091
    %v1163 = vunpack.c.l.b16 %v1092
    %v1164 = vunpack.c.l.b16 %v1093
    %v1165 = vunpack.c.l.b16 %v1094
    %v1166 = vunpack.c.l.b16 %v1095
    %v1167 = vunpack.c.l.b16 %v1096
    %v1168 = vunpack.c.l.b16 %v1097
    %v1169 = vunpack.c.l.b16 %v1098
    %v1170 = vunpack.c.l.b16 %v1099
    %v1171 = vunpack.c.l.b16 %v1100
    %v1172 = vunpack.c.l.b16 %v1101
    %v1173 = vunpack.c.l.b16 %v1102
    %v1174 = vpack.c.b16 %v1143, %v1142
    %v1175 = vpack.c.b16 %v1145, %v1144
    %v1176 = vpack.c.b16 %v1147, %v1146
    %v1177 = vpack.c.b16 %v1149, %v1148
    %v1178 = vpack.c.b16 %v1151, %v1150
    %v1179 = vpack.c.b16 %v1153, %v1152
    %v1180 = vpack.c.b16 %v1155, %v1154
    %v1181 = vpack.c.b16 %v1157, %v1156
    %v1182 = vpack.c.b16 %v1159, %v1158
    %v1183 = vpack.c.b16 %v1161, %v1160
    %v1184 = vpack.c.b16 %v1163, %v1162
    %v1185 = vpack.c.b16 %v1165, %v1164
    %v1186 = vpack.c.b16 %v1167, %v1166
    %v1187 = vpack.c.b16 %v1169, %v1168
    %v1188 = vpack.c.b16 %v1171, %v1170
    %v1189 = vpack.c.b16 %v1173, %v1172
    %1206 = vmatprep.subr.bf16.mxu0 0
    %1207 = vmatpush1.bf16.msra.mxu0 %v1181
    %1208 = vmatprep.subr.bf16.mxu0 0
    %1209 = vmatpush1.bf16.msra.mxu0 %v1180
    %1210 = vmatprep.subr.bf16.mxu0 0
    %1211 = vmatpush1.bf16.msra.mxu0 %v1179
    %1212 = vmatprep.subr.bf16.mxu0 0
    %1213 = vmatpush1.bf16.msra.mxu0 %v1178
    %1214 = vmatprep.subr.bf16.mxu0 0
    %1215 = vmatpush1.bf16.msra.mxu0 %v1177
    %1216 = vmatprep.subr.bf16.mxu0 0
    %1217 = vmatpush1.bf16.msra.mxu0 %v1176
    %1218 = vmatprep.subr.bf16.mxu0 0
    %1219 = vmatpush1.bf16.msra.mxu0 %v1175
    %1220 = vmatprep.subr.bf16.mxu0 0
    %1221 = vmatpush1.bf16.msra.mxu0 %v1174
    %1222 = vmatprep.subr.bf16.mxu0 0
    %1223 = vmatpush2.bf16.msra.mxu0 %v1189
    %1224 = vmatprep.subr.bf16.mxu0 0
    %1225 = vmatpush2.bf16.msra.mxu0 %v1188
    %1226 = vmatprep.subr.bf16.mxu0 0
    %1227 = vmatpush2.bf16.msra.mxu0 %v1187
    %1228 = vmatprep.subr.bf16.mxu0 0
    %1229 = vmatpush2.bf16.msra.mxu0 %v1186
    %1230 = vmatprep.subr.bf16.mxu0 0
    %1231 = vmatpush2.bf16.msra.mxu0 %v1185
    %1232 = vmatprep.subr.bf16.mxu0 0
    %1233 = vmatpush2.bf16.msra.mxu0 %v1184
    %1234 = vmatprep.subr.bf16.mxu0 0
    %1235 = vmatpush2.bf16.msra.mxu0 %v1183
    %1236 = vmatprep.subr.bf16.mxu0 0
    %1237 = vmatpush2.bf16.msra.mxu0 %v1182
    %1238 = vmatprep.mubr.bf16.mxu0 %v1070
    %1239 = vmatmul.mubr.bf16.gmra.mxu0 %v1069
    %v1240 = vpop.f32.mrf.mxu0
    %v1241 = vadd.f32 %v1108, %v1240
    %v1242 = vpop.f32.mrf.mxu0
    %v1243 = vpop.f32.mrf.mxu0
    %v1244 = vadd.f32 %v1108, %v1243
    %v1245 = vpop.f32.mrf.mxu0
    %1246 = vdwg.mxu0
    %v1247 = vmax.f32 %v1241, 0.0
    %v1248 = vmax.f32 %v1244, 0.0
    %v1249 = vpack.c.bf16 %v1248, %v1247
    %v1250 = vld [vmem:[%s7] sm:$0xf]
    %v1251 = vld [vmem:[%s7 + $0x4] sm:$0xf]
    %v1252 = vld [vmem:[%s7 + $0x8] sm:$0xf]
    %v1253 = vld [vmem:[%s7 + $0xc] sm:$0xf]
    %v1254 = vld [vmem:[%s7 + $0x10] sm:$0xf]
    %v1255 = vld [vmem:[%s7 + $0x14] sm:$0xf]
    %v1256 = vld [vmem:[%s7 + $0x18] sm:$0xf]
    %v1257 = vld [vmem:[%s7 + $0x1c] sm:$0xf]
    %v1258 = vld [vmem:[%s7 + $0x20] sm:$0xf]
    %v1259 = vld [vmem:[%s7 + $0x24] sm:$0xf]
    %v1260 = vld [vmem:[%s7 + $0x28] sm:$0xf]
    %v1261 = vld [vmem:[%s7 + $0x2c] sm:$0xf]
    %v1262 = vld [vmem:[%s7 + $0x30] sm:$0xf]
    %v1263 = vld [vmem:[%s7 + $0x34] sm:$0xf]
    %v1264 = vld [vmem:[%s7 + $0x38] sm:$0xf]
    %v1265 = vld [vmem:[%s7 + $0x3c] sm:$0xf]
    %v1266 = vld [vmem:[%s8] sm:$0x1]
    %v1268 = vlaneseq
    %v1269 = vshrl.u32 %v1268, 7
    %v1270 = vsub.s32 0, %v1269
    %v1271 = vrot.slane %v1266, %v1270
    %v1289 = vunpack.c.l.b16 %v1250
    %v1290 = vunpack.c.l.b16 %v1251
    %v1291 = vunpack.c.l.b16 %v1252
    %v1292 = vunpack.c.l.b16 %v1253
    %v1293 = vunpack.c.l.b16 %v1254
    %v1294 = vunpack.c.l.b16 %v1255
    %v1295 = vunpack.c.l.b16 %v1256
    %v1296 = vunpack.c.l.b16 %v1257
    %v1297 = vunpack.c.l.b16 %v1258
    %v1298 = vunpack.c.l.b16 %v1259
    %v1299 = vunpack.c.l.b16 %v1260
    %v1300 = vunpack.c.l.b16 %v1261
    %v1301 = vunpack.c.l.b16 %v1262
    %v1302 = vunpack.c.l.b16 %v1263
    %v1303 = vunpack.c.l.b16 %v1264
    %v1304 = vunpack.c.l.b16 %v1265
    %v1305 = vpack.c.b16 %v1290, %v1289
    %v1306 = vpack.c.b16 %v1292, %v1291
    %v1307 = vpack.c.b16 %v1294, %v1293
    %v1308 = vpack.c.b16 %v1296, %v1295
    %v1309 = vpack.c.b16 %v1298, %v1297
    %v1310 = vpack.c.b16 %v1300, %v1299
    %v1311 = vpack.c.b16 %v1302, %v1301
    %v1312 = vpack.c.b16 %v1304, %v1303
    %1321 = vmatprep.subr.bf16.mxu0 0
    %1322 = vmatpush1.bf16.msra.mxu0 %v1312
    %1323 = vmatprep.subr.bf16.mxu0 0
    %1324 = vmatpush1.bf16.msra.mxu0 %v1311
    %1325 = vmatprep.subr.bf16.mxu0 0
    %1326 = vmatpush1.bf16.msra.mxu0 %v1310
    %1327 = vmatprep.subr.bf16.mxu0 0
    %1328 = vmatpush1.bf16.msra.mxu0 %v1309
    %1329 = vmatprep.subr.bf16.mxu0 0
    %1330 = vmatpush1.bf16.msra.mxu0 %v1308
    %1331 = vmatprep.subr.bf16.mxu0 0
    %1332 = vmatpush1.bf16.msra.mxu0 %v1307
    %1333 = vmatprep.subr.bf16.mxu0 0
    %1334 = vmatpush1.bf16.msra.mxu0 %v1306
    %1335 = vmatprep.subr.bf16.mxu0 0
    %1336 = vmatpush1.bf16.msra.mxu0 %v1305
    %1337 = vmatprep.subr.bf16.mxu0 0
    %1338 = vmatpush2.bf16.msra.mxu0 0
    %1339 = vmatprep.subr.bf16.mxu0 0
    %1340 = vmatpush2.bf16.msra.mxu0 0
    %1341 = vmatprep.subr.bf16.mxu0 0
    %1342 = vmatpush2.bf16.msra.mxu0 0
    %1343 = vmatprep.subr.bf16.mxu0 0
    %1344 = vmatpush2.bf16.msra.mxu0 0
    %1345 = vmatprep.subr.bf16.mxu0 0
    %1346 = vmatpush2.bf16.msra.mxu0 0
    %1347 = vmatprep.subr.bf16.mxu0 0
    %1348 = vmatpush2.bf16.msra.mxu0 0
    %1349 = vmatprep.subr.bf16.mxu0 0
    %1350 = vmatpush2.bf16.msra.mxu0 0
    %1351 = vmatprep.subr.bf16.mxu0 0
    %1352 = vmatpush2.bf16.msra.mxu0 0
    %1353 = vmatprep.mubr.bf16.mxu0 0
    %1354 = vmatmul.mubr.bf16.gmra.mxu0 %v1249
    %v1355 = vpop.f32.mrf.mxu0
    %v1356 = vadd.f32 %v1271, %v1355
    %v1357 = vpop.f32.mrf.mxu0
    %v1358 = vpop.f32.mrf.mxu0
    %v1359 = vadd.f32 %v1271, %v1358
    %v1360 = vpop.f32.mrf.mxu0
    %1361 = vdwg.mxu0
    %v1362 = vmax.f32 %v1356, 0.0
    %v1363 = vmax.f32 %v1359, 0.0
    %v1364 = vpack.c.bf16 %v1363, %v1362
    %v1365 = vld [vmem:[%s9] sm:$0xf]
    %v1366 = vld [vmem:[%s9 + $0x4] sm:$0xf]
    %v1367 = vld [vmem:[%s9 + $0x8] sm:$0xf]
    %v1368 = vld [vmem:[%s9 + $0xc] sm:$0xf]
    %v1369 = vld [vmem:[%s10] sm:$0x1]
    %v1371 = vlaneseq
    %v1372 = vshrl.u32 %v1371, 7
    %v1373 = vsub.s32 0, %v1372
    %v1374 = vrot.slane %v1369, %v1373
    %v1380 = vunpack.c.l.b16 %v1365
    %v1381 = vunpack.c.l.b16 %v1366
    %v1382 = vunpack.c.l.b16 %v1367
    %v1383 = vunpack.c.l.b16 %v1368
    %v1384 = vpack.c.b16 %v1381, %v1380
    %v1385 = vpack.c.b16 %v1383, %v1382
    %vm1388 = vcmask 261120
    %v1390 = vsel %vm1388, %v1364, 0
    %1392 = vmatprep.subr.bf16.mxu0 0
    %1393 = vmatpush1.bf16.msra.mxu0 0
    %1394 = vmatprep.subr.bf16.mxu0 0
    %1395 = vmatpush1.bf16.msra.mxu0 0
    %1396 = vmatprep.subr.bf16.mxu0 0
    %1397 = vmatpush1.bf16.msra.mxu0 0
    %1398 = vmatprep.subr.bf16.mxu0 0
    %1399 = vmatpush1.bf16.msra.mxu0 0
    %1400 = vmatprep.subr.bf16.mxu0 0
    %1401 = vmatpush1.bf16.msra.mxu0 0
    %1402 = vmatprep.subr.bf16.mxu0 0
    %1403 = vmatpush1.bf16.msra.mxu0 0
    %1404 = vmatprep.subr.bf16.mxu0 0
    %1405 = vmatpush1.bf16.msra.mxu0 %v1385
    %1406 = vmatprep.subr.bf16.mxu0 0
    %1407 = vmatpush1.bf16.msra.mxu0 %v1384
    %1408 = vmatprep.subr.bf16.mxu0 0
    %1409 = vmatpush2.bf16.msra.mxu0 0
    %1410 = vmatprep.subr.bf16.mxu0 0
    %1411 = vmatpush2.bf16.msra.mxu0 0
    %1412 = vmatprep.subr.bf16.mxu0 0
    %1413 = vmatpush2.bf16.msra.mxu0 0
    %1414 = vmatprep.subr.bf16.mxu0 0
    %1415 = vmatpush2.bf16.msra.mxu0 0
    %1416 = vmatprep.subr.bf16.mxu0 0
    %1417 = vmatpush2.bf16.msra.mxu0 0
    %1418 = vmatprep.subr.bf16.mxu0 0
    %1419 = vmatpush2.bf16.msra.mxu0 0
    %1420 = vmatprep.subr.bf16.mxu0 0
    %1421 = vmatpush2.bf16.msra.mxu0 0
    %1422 = vmatprep.subr.bf16.mxu0 0
    %1423 = vmatpush2.bf16.msra.mxu0 0
    %1424 = vmatprep.mubr.bf16.mxu0 0
    %1425 = vmatmul.mubr.bf16.gmra.mxu0 %v1390
    %v1426 = vpop.f32.mrf.mxu0
    %v1427 = vadd.f32 %v1374, %v1426
    %v1428 = vpop.f32.mrf.mxu0
    %v1429 = vpop.f32.mrf.mxu0
    %v1430 = vadd.f32 %v1374, %v1429
    %v1431 = vpop.f32.mrf.mxu0
    %1432 = vdwg.mxu0
    %vm1433 = vcmask 64512
    %1434 = vst.msk [vmem:[%s11] sm:$0xff] %vm1433, %v1427
    %1435 = vst.msk [vmem:[%s11 + $0x8] sm:$0xff] %vm1433, %v1430
    // Predicated region
    $region54: #{_encoder_forward_impl.1} parent=1 // pred_check
      _
    $region55: #{_encoder_forward_impl.1} parent=1 // pred_check_branch
      %1437 = sbr.rel (0) target = $region57
    $region56: #{_encoder_forward_impl.1} parent=1 // pred_region
      _
    $region57: #{_encoder_forward_impl.1} parent=1 // pred_fallthru
      _
    // Predicated region
    $region58: #{_encoder_forward_impl.1} parent=1 // pred_check
      _
    $region59: #{_encoder_forward_impl.1} parent=1 // pred_check_branch
      %1439 = sbr.rel (0) target = $region61
    $region60: #{_encoder_forward_impl.1} parent=1 // pred_region
      _
    $region61: #{_encoder_forward_impl.1} parent=1 // pred_fallthru
      _
    %1440 = vsyncpa [#allocation3], 1
    %1441 = vsyncpa [#allocation5], 1

</llo_original>
